<compile_context>
chip_gen: v7x
topology: tpu7x:2x2x1
jax: 0.10.0
libtpu: 0.0.40
codegen_flags: <defaults>
</compile_context>

<pallas_src>
import functools

import jax
import jax.numpy as jnp
from jax import lax
from jax.experimental import pallas as pl
from jax.experimental.pallas import tpu as pltpu


def _abs_or_sq(d, L):
    d = d.astype(jnp.float32)            # f32 accumulation; diff stays in input dtype
    return jnp.abs(d) if L == 1 else d * d


def _write_partials(out_ref, h_tv, w_tv):
    # Lane-dense (8, 128) output block; h partial at [0, 0], w partial at [1, 0].
    row_id = lax.broadcasted_iota(jnp.int32, (8, 128), 0)
    out_ref[0, :, :] = (jnp.where(row_id == 0, h_tv, 0.0)
                        + jnp.where(row_id == 1, w_tv, 0.0))


def _tv_kernel_planes(x_ref, out_ref, *, L):
    """Block = (planes, H, W); diffs along the last two axes (W >= 128 path)."""
    x = x_ref[...]
    _, H, W = x.shape
    zero = jnp.float32(0.0)
    h_tv = jnp.sum(_abs_or_sq(x[:, 1:, :] - x[:, :-1, :], L)) if H > 1 else zero
    w_tv = jnp.sum(_abs_or_sq(x[:, :, 1:] - x[:, :, :-1], L)) if W > 1 else zero
    _write_partials(out_ref, h_tv, w_tv)


def _tv_kernel_folded(x_ref, out_ref, *, H, W, L):
    """Block = (planes, H*W): each (H, W) plane folded into one lane-dense row."""
    t = x_ref[...]                       # (planes, H*W), input dtype
    HW = H * W
    zero = jnp.float32(0.0)

    # h-direction: x[p, h+1, w] - x[p, h, w]  ==  t[p, c + W] - t[p, c], c < HW - W.
    h_tv = jnp.sum(_abs_or_sq(t[:, W:] - t[:, :HW - W], L)) if H > 1 else zero

    # w-direction: lane shift by 1, then subtract the H-1 spurious "seam"
    # pairs that straddle two original rows (columns g*W-1 / g*W).
    if HW > 1:
        w_tv = jnp.sum(_abs_or_sq(t[:, 1:] - t[:, :-1], L))
        for g in range(1, H):
            c = g * W
            w_tv -= jnp.sum(_abs_or_sq(t[:, c:c + 1] - t[:, c - 1:c], L))
    else:
        w_tv = zero

    _write_partials(out_ref, h_tv, w_tv)


def _choose_planes_per_block(num_planes, plane_bytes, target_bytes, multiple_of):
    want = max(1, target_bytes // max(plane_bytes, 1))
    want = max(multiple_of, (want // multiple_of) * multiple_of)
    cap = -(-num_planes // multiple_of) * multiple_of       # ceil to multiple_of
    return min(want, cap)


def tv_loss(x, *, tvloss_weight=1.0, size_average=True, L=1,
            target_block_bytes=4 * 1024 * 1024):
    """Pallas TPU implementation of TVLoss.forward (NCHW input)."""
    B, C, H, W = x.shape
    P = B * C
    itemsize = x.dtype.itemsize
    plane_bytes = H * W * itemsize

    # Lane-dense folded path for narrow images (W < 128); the fold is a free
    # reshape of contiguous data.  Seam corrections are unrolled, so cap H.
    fold_planes = (W < 128) and (H <= 64)

    if fold_planes:
        planes_per_block = _choose_planes_per_block(
            P, plane_bytes, target_block_bytes, 8)
        p_padded = -(-P // planes_per_block) * planes_per_block
        num_blocks = p_padded // planes_per_block
        xr = x.reshape(P, H * W)
        if p_padded != P:                # zero planes contribute 0 to both sums
            xr = jnp.concatenate(
                [xr, jnp.zeros((p_padded - P, H * W), x.dtype)], axis=0)
        kernel = functools.partial(_tv_kernel_folded, H=H, W=W, L=L)
        in_spec = pl.BlockSpec((planes_per_block, H * W), lambda i: (i, 0))
    else:
        planes_per_block = _choose_planes_per_block(
            P, plane_bytes, target_block_bytes, 1)
        p_padded = -(-P // planes_per_block) * planes_per_block
        num_blocks = p_padded // planes_per_block
        xr = x.reshape(P, H, W)
        if p_padded != P:
            xr = jnp.concatenate(
                [xr, jnp.zeros((p_padded - P, H, W), x.dtype)], axis=0)
        kernel = functools.partial(_tv_kernel_planes, L=L)
        in_spec = pl.BlockSpec((planes_per_block, H, W), lambda i: (i, 0, 0))

    block_bytes = planes_per_block * plane_bytes
    vmem_limit = int(min(128 * 1024 * 1024,
                         max(32 * 1024 * 1024, 2 * block_bytes + 2 * 1024 * 1024)))

    partials = pl.pallas_call(
        kernel,
        out_shape=jax.ShapeDtypeStruct((num_blocks, 8, 128), jnp.float32),
        grid=(num_blocks,),
        in_specs=[in_spec],
        out_specs=pl.BlockSpec((1, 8, 128), lambda i: (i, 0, 0)),
        compiler_params=pltpu.CompilerParams(
            dimension_semantics=("parallel",),
            vmem_limit_bytes=vmem_limit,
        ),
    )(xr)

    h_tv = jnp.sum(partials[:, 0, 0])
    w_tv = jnp.sum(partials[:, 1, 0])

    if not size_average:
        # Matches the PyTorch module: no normalization in this branch.
        return tvloss_weight * (h_tv + w_tv)

    count_h = C * (H - 1) * W
    count_w = C * H * (W - 1)
    return tvloss_weight * 2.0 * (h_tv / count_h + w_tv / count_w) / B


if __name__ == "__main__":
    def reference(x, weight=1.0, size_average=True, L=1):
        B, C, H, W = x.shape
        dh = x[:, :, 1:, :] - x[:, :, :-1, :]
        dw = x[:, :, :, 1:] - x[:, :, :, :-1]
        if L == 1:
            h_tv, w_tv = jnp.sum(jnp.abs(dh)), jnp.sum(jnp.abs(dw))
        else:
            h_tv, w_tv = jnp.sum(dh * dh), jnp.sum(dw * dw)
        if not size_average:
            return weight * (h_tv + w_tv)
        count_h = C * (H - 1) * W
        count_w = C * H * (W - 1)
        return weight * 2.0 * (h_tv / count_h + w_tv / count_w) / B

    key = jax.random.PRNGKey(0)
    k1, k2 = jax.random.split(key)

    # Narrow-W case (W < 128) -> lane-folded kernel path, L=1 and L=2.
    x1 = jax.random.normal(k1, (2, 4, 16, 16), dtype=jnp.float32)
    for L in (1, 2):
        out = jax.block_until_ready(tv_loss(x1, tvloss_weight=1.0,
                                            size_average=True, L=L))
        ref = reference(x1, L=L)
        assert jnp.allclose(out, ref, rtol=1e-5, atol=1e-5), (L, out, ref)

    # Wide-W case (W >= 128) -> plane-batched kernel path.
    x2 = jax.random.normal(k2, (1, 2, 8, 128), dtype=jnp.float32)
    out2 = jax.block_until_ready(tv_loss(x2, L=1))
    ref2 = reference(x2, L=1)
    assert jnp.allclose(out2, ref2, rtol=1e-5, atol=1e-5), (out2, ref2)

    print("KERNEL_OK")
</pallas_src>

<mosaic_0001>
module attributes {stable_mosaic.version = 11 : i64} {
  func.func @_tv_kernel_folded(%arg0: i32, %arg1: memref<8x256xf32, #tpu.memory_space<vmem>>, %arg2: memref<1x8x128xf32, #tpu.memory_space<vmem>>) attributes {dimension_semantics = [#tpu.dimension_semantics<parallel>], iteration_bounds = array<i64: 1>, scalar_prefetch = 0 : i64, scratch_operands = 0 : i64, tpu.core_type = #tpu.core_type<tc>, window_params = [{transform_indices = @transform_0, window_bounds = array<i64: 8, 256>}, {transform_indices = @transform_1, window_bounds = array<i64: 1, 8, 128>}]} {
    %c0 = arith.constant 0 : index
    %c0_0 = arith.constant 0 : index
    %0 = vector.load %arg1[%c0, %c0_0] : memref<8x256xf32, #tpu.memory_space<vmem>>, vector<8x256xf32>
    %1 = vector.extract_strided_slice %0 {offsets = [0, 16], sizes = [8, 240], strides = [1, 1]} : vector<8x256xf32> to vector<8x240xf32>
    %2 = vector.extract_strided_slice %0 {offsets = [0, 0], sizes = [8, 240], strides = [1, 1]} : vector<8x256xf32> to vector<8x240xf32>
    %3 = arith.subf %1, %2 : vector<8x240xf32>
    %4 = math.absf %3 : vector<8x240xf32>
    %5 = vector.shape_cast %4 : vector<8x240xf32> to vector<1x8x240xf32>
    %cst = arith.constant dense<0.000000e+00> : vector<1xf32>
    %6 = vector.multi_reduction <add>, %5, %cst [1, 2] : vector<1x8x240xf32> to vector<1xf32>
    %7 = vector.shape_cast %6 : vector<1xf32> to vector<1x1x1xf32>
    %8 = vector.extract %7[0, 0, 0] : f32 from vector<1x1x1xf32>
    %9 = vector.extract_strided_slice %0 {offsets = [0, 1], sizes = [8, 255], strides = [1, 1]} : vector<8x256xf32> to vector<8x255xf32>
    %10 = vector.extract_strided_slice %0 {offsets = [0, 0], sizes = [8, 255], strides = [1, 1]} : vector<8x256xf32> to vector<8x255xf32>
    %11 = arith.subf %9, %10 : vector<8x255xf32>
    %12 = math.absf %11 : vector<8x255xf32>
    %13 = vector.shape_cast %12 : vector<8x255xf32> to vector<1x8x255xf32>
    %cst_1 = arith.constant dense<0.000000e+00> : vector<1xf32>
    %14 = vector.multi_reduction <add>, %13, %cst_1 [1, 2] : vector<1x8x255xf32> to vector<1xf32>
    %15 = vector.shape_cast %14 : vector<1xf32> to vector<1x1x1xf32>
    %16 = vector.extract %15[0, 0, 0] : f32 from vector<1x1x1xf32>
    %17 = vector.extract_strided_slice %0 {offsets = [0, 16], sizes = [8, 1], strides = [1, 1]} : vector<8x256xf32> to vector<8x1xf32>
    %18 = vector.extract_strided_slice %0 {offsets = [0, 15], sizes = [8, 1], strides = [1, 1]} : vector<8x256xf32> to vector<8x1xf32>
    %19 = arith.subf %17, %18 : vector<8x1xf32>
    %20 = math.absf %19 : vector<8x1xf32>
    %21 = vector.shape_cast %20 : vector<8x1xf32> to vector<1x8x1xf32>
    %cst_2 = arith.constant dense<0.000000e+00> : vector<1xf32>
    %22 = vector.multi_reduction <add>, %21, %cst_2 [1, 2] : vector<1x8x1xf32> to vector<1xf32>
    %23 = vector.shape_cast %22 : vector<1xf32> to vector<1x1x1xf32>
    %24 = vector.extract %23[0, 0, 0] : f32 from vector<1x1x1xf32>
    %25 = arith.subf %16, %24 : f32
    %26 = vector.extract_strided_slice %0 {offsets = [0, 32], sizes = [8, 1], strides = [1, 1]} : vector<8x256xf32> to vector<8x1xf32>
    %27 = vector.extract_strided_slice %0 {offsets = [0, 31], sizes = [8, 1], strides = [1, 1]} : vector<8x256xf32> to vector<8x1xf32>
    %28 = arith.subf %26, %27 : vector<8x1xf32>
    %29 = math.absf %28 : vector<8x1xf32>
    %30 = vector.shape_cast %29 : vector<8x1xf32> to vector<1x8x1xf32>
    %cst_3 = arith.constant dense<0.000000e+00> : vector<1xf32>
    %31 = vector.multi_reduction <add>, %30, %cst_3 [1, 2] : vector<1x8x1xf32> to vector<1xf32>
    %32 = vector.shape_cast %31 : vector<1xf32> to vector<1x1x1xf32>
    %33 = vector.extract %32[0, 0, 0] : f32 from vector<1x1x1xf32>
    %34 = arith.subf %25, %33 : f32
    %35 = vector.extract_strided_slice %0 {offsets = [0, 48], sizes = [8, 1], strides = [1, 1]} : vector<8x256xf32> to vector<8x1xf32>
    %36 = vector.extract_strided_slice %0 {offsets = [0, 47], sizes = [8, 1], strides = [1, 1]} : vector<8x256xf32> to vector<8x1xf32>
    %37 = arith.subf %35, %36 : vector<8x1xf32>
    %38 = math.absf %37 : vector<8x1xf32>
    %39 = vector.shape_cast %38 : vector<8x1xf32> to vector<1x8x1xf32>
    %cst_4 = arith.constant dense<0.000000e+00> : vector<1xf32>
    %40 = vector.multi_reduction <add>, %39, %cst_4 [1, 2] : vector<1x8x1xf32> to vector<1xf32>
    %41 = vector.shape_cast %40 : vector<1xf32> to vector<1x1x1xf32>
    %42 = vector.extract %41[0, 0, 0] : f32 from vector<1x1x1xf32>
    %43 = arith.subf %34, %42 : f32
    %44 = vector.extract_strided_slice %0 {offsets = [0, 64], sizes = [8, 1], strides = [1, 1]} : vector<8x256xf32> to vector<8x1xf32>
    %45 = vector.extract_strided_slice %0 {offsets = [0, 63], sizes = [8, 1], strides = [1, 1]} : vector<8x256xf32> to vector<8x1xf32>
    %46 = arith.subf %44, %45 : vector<8x1xf32>
    %47 = math.absf %46 : vector<8x1xf32>
    %48 = vector.shape_cast %47 : vector<8x1xf32> to vector<1x8x1xf32>
    %cst_5 = arith.constant dense<0.000000e+00> : vector<1xf32>
    %49 = vector.multi_reduction <add>, %48, %cst_5 [1, 2] : vector<1x8x1xf32> to vector<1xf32>
    %50 = vector.shape_cast %49 : vector<1xf32> to vector<1x1x1xf32>
    %51 = vector.extract %50[0, 0, 0] : f32 from vector<1x1x1xf32>
    %52 = arith.subf %43, %51 : f32
    %53 = vector.extract_strided_slice %0 {offsets = [0, 80], sizes = [8, 1], strides = [1, 1]} : vector<8x256xf32> to vector<8x1xf32>
    %54 = vector.extract_strided_slice %0 {offsets = [0, 79], sizes = [8, 1], strides = [1, 1]} : vector<8x256xf32> to vector<8x1xf32>
    %55 = arith.subf %53, %54 : vector<8x1xf32>
    %56 = math.absf %55 : vector<8x1xf32>
    %57 = vector.shape_cast %56 : vector<8x1xf32> to vector<1x8x1xf32>
    %cst_6 = arith.constant dense<0.000000e+00> : vector<1xf32>
    %58 = vector.multi_reduction <add>, %57, %cst_6 [1, 2] : vector<1x8x1xf32> to vector<1xf32>
    %59 = vector.shape_cast %58 : vector<1xf32> to vector<1x1x1xf32>
    %60 = vector.extract %59[0, 0, 0] : f32 from vector<1x1x1xf32>
    %61 = arith.subf %52, %60 : f32
    %62 = vector.extract_strided_slice %0 {offsets = [0, 96], sizes = [8, 1], strides = [1, 1]} : vector<8x256xf32> to vector<8x1xf32>
    %63 = vector.extract_strided_slice %0 {offsets = [0, 95], sizes = [8, 1], strides = [1, 1]} : vector<8x256xf32> to vector<8x1xf32>
    %64 = arith.subf %62, %63 : vector<8x1xf32>
    %65 = math.absf %64 : vector<8x1xf32>
    %66 = vector.shape_cast %65 : vector<8x1xf32> to vector<1x8x1xf32>
    %cst_7 = arith.constant dense<0.000000e+00> : vector<1xf32>
    %67 = vector.multi_reduction <add>, %66, %cst_7 [1, 2] : vector<1x8x1xf32> to vector<1xf32>
    %68 = vector.shape_cast %67 : vector<1xf32> to vector<1x1x1xf32>
    %69 = vector.extract %68[0, 0, 0] : f32 from vector<1x1x1xf32>
    %70 = arith.subf %61, %69 : f32
    %71 = vector.extract_strided_slice %0 {offsets = [0, 112], sizes = [8, 1], strides = [1, 1]} : vector<8x256xf32> to vector<8x1xf32>
    %72 = vector.extract_strided_slice %0 {offsets = [0, 111], sizes = [8, 1], strides = [1, 1]} : vector<8x256xf32> to vector<8x1xf32>
    %73 = arith.subf %71, %72 : vector<8x1xf32>
    %74 = math.absf %73 : vector<8x1xf32>
    %75 = vector.shape_cast %74 : vector<8x1xf32> to vector<1x8x1xf32>
    %cst_8 = arith.constant dense<0.000000e+00> : vector<1xf32>
    %76 = vector.multi_reduction <add>, %75, %cst_8 [1, 2] : vector<1x8x1xf32> to vector<1xf32>
    %77 = vector.shape_cast %76 : vector<1xf32> to vector<1x1x1xf32>
    %78 = vector.extract %77[0, 0, 0] : f32 from vector<1x1x1xf32>
    %79 = arith.subf %70, %78 : f32
    %80 = vector.extract_strided_slice %0 {offsets = [0, 128], sizes = [8, 1], strides = [1, 1]} : vector<8x256xf32> to vector<8x1xf32>
    %81 = vector.extract_strided_slice %0 {offsets = [0, 127], sizes = [8, 1], strides = [1, 1]} : vector<8x256xf32> to vector<8x1xf32>
    %82 = arith.subf %80, %81 : vector<8x1xf32>
    %83 = math.absf %82 : vector<8x1xf32>
    %84 = vector.shape_cast %83 : vector<8x1xf32> to vector<1x8x1xf32>
    %cst_9 = arith.constant dense<0.000000e+00> : vector<1xf32>
    %85 = vector.multi_reduction <add>, %84, %cst_9 [1, 2] : vector<1x8x1xf32> to vector<1xf32>
    %86 = vector.shape_cast %85 : vector<1xf32> to vector<1x1x1xf32>
    %87 = vector.extract %86[0, 0, 0] : f32 from vector<1x1x1xf32>
    %88 = arith.subf %79, %87 : f32
    %89 = vector.extract_strided_slice %0 {offsets = [0, 144], sizes = [8, 1], strides = [1, 1]} : vector<8x256xf32> to vector<8x1xf32>
    %90 = vector.extract_strided_slice %0 {offsets = [0, 143], sizes = [8, 1], strides = [1, 1]} : vector<8x256xf32> to vector<8x1xf32>
    %91 = arith.subf %89, %90 : vector<8x1xf32>
    %92 = math.absf %91 : vector<8x1xf32>
    %93 = vector.shape_cast %92 : vector<8x1xf32> to vector<1x8x1xf32>
    %cst_10 = arith.constant dense<0.000000e+00> : vector<1xf32>
    %94 = vector.multi_reduction <add>, %93, %cst_10 [1, 2] : vector<1x8x1xf32> to vector<1xf32>
    %95 = vector.shape_cast %94 : vector<1xf32> to vector<1x1x1xf32>
    %96 = vector.extract %95[0, 0, 0] : f32 from vector<1x1x1xf32>
    %97 = arith.subf %88, %96 : f32
    %98 = vector.extract_strided_slice %0 {offsets = [0, 160], sizes = [8, 1], strides = [1, 1]} : vector<8x256xf32> to vector<8x1xf32>
    %99 = vector.extract_strided_slice %0 {offsets = [0, 159], sizes = [8, 1], strides = [1, 1]} : vector<8x256xf32> to vector<8x1xf32>
    %100 = arith.subf %98, %99 : vector<8x1xf32>
    %101 = math.absf %100 : vector<8x1xf32>
    %102 = vector.shape_cast %101 : vector<8x1xf32> to vector<1x8x1xf32>
    %cst_11 = arith.constant dense<0.000000e+00> : vector<1xf32>
    %103 = vector.multi_reduction <add>, %102, %cst_11 [1, 2] : vector<1x8x1xf32> to vector<1xf32>
    %104 = vector.shape_cast %103 : vector<1xf32> to vector<1x1x1xf32>
    %105 = vector.extract %104[0, 0, 0] : f32 from vector<1x1x1xf32>
    %106 = arith.subf %97, %105 : f32
    %107 = vector.extract_strided_slice %0 {offsets = [0, 176], sizes = [8, 1], strides = [1, 1]} : vector<8x256xf32> to vector<8x1xf32>
    %108 = vector.extract_strided_slice %0 {offsets = [0, 175], sizes = [8, 1], strides = [1, 1]} : vector<8x256xf32> to vector<8x1xf32>
    %109 = arith.subf %107, %108 : vector<8x1xf32>
    %110 = math.absf %109 : vector<8x1xf32>
    %111 = vector.shape_cast %110 : vector<8x1xf32> to vector<1x8x1xf32>
    %cst_12 = arith.constant dense<0.000000e+00> : vector<1xf32>
    %112 = vector.multi_reduction <add>, %111, %cst_12 [1, 2] : vector<1x8x1xf32> to vector<1xf32>
    %113 = vector.shape_cast %112 : vector<1xf32> to vector<1x1x1xf32>
    %114 = vector.extract %113[0, 0, 0] : f32 from vector<1x1x1xf32>
    %115 = arith.subf %106, %114 : f32
    %116 = vector.extract_strided_slice %0 {offsets = [0, 192], sizes = [8, 1], strides = [1, 1]} : vector<8x256xf32> to vector<8x1xf32>
    %117 = vector.extract_strided_slice %0 {offsets = [0, 191], sizes = [8, 1], strides = [1, 1]} : vector<8x256xf32> to vector<8x1xf32>
    %118 = arith.subf %116, %117 : vector<8x1xf32>
    %119 = math.absf %118 : vector<8x1xf32>
    %120 = vector.shape_cast %119 : vector<8x1xf32> to vector<1x8x1xf32>
    %cst_13 = arith.constant dense<0.000000e+00> : vector<1xf32>
    %121 = vector.multi_reduction <add>, %120, %cst_13 [1, 2] : vector<1x8x1xf32> to vector<1xf32>
    %122 = vector.shape_cast %121 : vector<1xf32> to vector<1x1x1xf32>
    %123 = vector.extract %122[0, 0, 0] : f32 from vector<1x1x1xf32>
    %124 = arith.subf %115, %123 : f32
    %125 = vector.extract_strided_slice %0 {offsets = [0, 208], sizes = [8, 1], strides = [1, 1]} : vector<8x256xf32> to vector<8x1xf32>
    %126 = vector.extract_strided_slice %0 {offsets = [0, 207], sizes = [8, 1], strides = [1, 1]} : vector<8x256xf32> to vector<8x1xf32>
    %127 = arith.subf %125, %126 : vector<8x1xf32>
    %128 = math.absf %127 : vector<8x1xf32>
    %129 = vector.shape_cast %128 : vector<8x1xf32> to vector<1x8x1xf32>
    %cst_14 = arith.constant dense<0.000000e+00> : vector<1xf32>
    %130 = vector.multi_reduction <add>, %129, %cst_14 [1, 2] : vector<1x8x1xf32> to vector<1xf32>
    %131 = vector.shape_cast %130 : vector<1xf32> to vector<1x1x1xf32>
    %132 = vector.extract %131[0, 0, 0] : f32 from vector<1x1x1xf32>
    %133 = arith.subf %124, %132 : f32
    %134 = vector.extract_strided_slice %0 {offsets = [0, 224], sizes = [8, 1], strides = [1, 1]} : vector<8x256xf32> to vector<8x1xf32>
    %135 = vector.extract_strided_slice %0 {offsets = [0, 223], sizes = [8, 1], strides = [1, 1]} : vector<8x256xf32> to vector<8x1xf32>
    %136 = arith.subf %134, %135 : vector<8x1xf32>
    %137 = math.absf %136 : vector<8x1xf32>
    %138 = vector.shape_cast %137 : vector<8x1xf32> to vector<1x8x1xf32>
    %cst_15 = arith.constant dense<0.000000e+00> : vector<1xf32>
    %139 = vector.multi_reduction <add>, %138, %cst_15 [1, 2] : vector<1x8x1xf32> to vector<1xf32>
    %140 = vector.shape_cast %139 : vector<1xf32> to vector<1x1x1xf32>
    %141 = vector.extract %140[0, 0, 0] : f32 from vector<1x1x1xf32>
    %142 = arith.subf %133, %141 : f32
    %143 = vector.extract_strided_slice %0 {offsets = [0, 240], sizes = [8, 1], strides = [1, 1]} : vector<8x256xf32> to vector<8x1xf32>
    %144 = vector.extract_strided_slice %0 {offsets = [0, 239], sizes = [8, 1], strides = [1, 1]} : vector<8x256xf32> to vector<8x1xf32>
    %145 = arith.subf %143, %144 : vector<8x1xf32>
    %146 = math.absf %145 : vector<8x1xf32>
    %147 = vector.shape_cast %146 : vector<8x1xf32> to vector<1x8x1xf32>
    %cst_16 = arith.constant dense<0.000000e+00> : vector<1xf32>
    %148 = vector.multi_reduction <add>, %147, %cst_16 [1, 2] : vector<1x8x1xf32> to vector<1xf32>
    %149 = vector.shape_cast %148 : vector<1xf32> to vector<1x1x1xf32>
    %150 = vector.extract %149[0, 0, 0] : f32 from vector<1x1x1xf32>
    %151 = arith.subf %142, %150 : f32
    %152 = tpu.iota {dimensions = array<i32: 0>} : vector<8x128xi32>
    %c0_i32 = arith.constant 0 : i32
    %153 = vector.broadcast %c0_i32 : i32 to vector<8x128xi32>
    %154 = arith.cmpi eq, %152, %153 : vector<8x128xi32>
    %cst_17 = arith.constant 0.000000e+00 : f32
    %155 = vector.broadcast %8 : f32 to vector<8x128xf32>
    %156 = vector.broadcast %cst_17 : f32 to vector<8x128xf32>
    %157 = arith.select %154, %155, %156 : vector<8x128xi1>, vector<8x128xf32>
    %c1_i32 = arith.constant 1 : i32
    %158 = vector.broadcast %c1_i32 : i32 to vector<8x128xi32>
    %159 = arith.cmpi eq, %152, %158 : vector<8x128xi32>
    %cst_18 = arith.constant 0.000000e+00 : f32
    %160 = vector.broadcast %151 : f32 to vector<8x128xf32>
    %161 = vector.broadcast %cst_18 : f32 to vector<8x128xf32>
    %162 = arith.select %159, %160, %161 : vector<8x128xi1>, vector<8x128xf32>
    %163 = arith.addf %157, %162 : vector<8x128xf32>
    %c0_19 = arith.constant 0 : index
    %c0_20 = arith.constant 0 : index
    %c0_21 = arith.constant 0 : index
    %164 = vector.load %arg2[%c0_19, %c0_20, %c0_21] : memref<1x8x128xf32, #tpu.memory_space<vmem>>, vector<1x8x128xf32>
    %165 = vector.shape_cast %164 : vector<1x8x128xf32> to vector<8x128xf32>
    %166 = vector.shape_cast %163 : vector<8x128xf32> to vector<1x8x128xf32>
    tpu.vector_store %arg2[%c0_19, %c0_20, %c0_21], %166 {strides = array<i32>} : memref<1x8x128xf32, #tpu.memory_space<vmem>>, vector<1x8x128xf32>,
    return
  }
  func.func @transform_0(%arg0: i32) -> (i32, i32) {
    %c0_i32 = arith.constant 0 : i32
    %c0_i32_0 = arith.constant 0 : i32
    return %arg0, %c0_i32 : i32, i32
  }
  func.func @transform_1(%arg0: i32) -> (i32, i32, i32) {
    %c0_i32 = arith.constant 0 : i32
    %c0_i32_0 = arith.constant 0 : i32
    %c0_i32_1 = arith.constant 0 : i32
    return %arg0, %c0_i32, %c0_i32_0 : i32, i32, i32
  }
}

</mosaic_0001>

<llo_original>
// kernel: tpu_custom_call.1
$region0: #{tpu_custom_call.1}
  #allocation0 [shape = 'u32[]', space=smem, size = 0x4, offset = 0x4, fixed_abs, tag = 'smem constant byte address 0x4 - core index']
  #allocation1 [shape = 'u32[144,128]{1,0:T(1,128)}', space=vmem, size = 0x12000, scoped, tag = 'internal scratch']
  %s0 = inlined_call_operand.hbm [shape: f32[8,256], index: 0, kind: input, shape index: {}]
  %s1 = inlined_call_operand.hbm [shape: f32[1,8,128], index: 1, kind: output, shape index: {}]
  %s2 = sld [smem:[#allocation0]]
  $region18: #{tpu_custom_call.1} parent=0
    _
  %s4 = ssub.s32 1, %s2
  %s5 = scalar_select 0, %s4, %s2
  $region1: #{tpu_custom_call.1} parent=0
    #allocation2 [shape = 'u8[8192]{0}', space=vmem, size = 0x2000, scoped, tag = 'input window, operand 0, single buffered']
    #allocation3 [shape = 's32[1]{0}', space=sflag, size = 0x4, scoped, tag = 'scoped memory for tpu_custom_call.1']
    #allocation4 [shape = 's32[1]{0}', space=sflag, size = 0x4, scoped, tag = 'scoped memory for tpu_custom_call.1']
    #allocation5 [shape = 'u8[4096]{0}', space=vmem, size = 0x1000, scoped, tag = 'output window, operand 0, single buffered']
    %6 = vsyncpa [#allocation3], 0
    %7 = vsyncpa [#allocation4], 0
    // Predicated region
    $region2: #{tpu_custom_call.1} parent=1 // pred_check
      _
    $region3: #{tpu_custom_call.1} parent=1 // pred_check_branch
      %9 = sbr.rel (0) target = $region5
    $region4: #{tpu_custom_call.1} parent=1 // pred_region
      %s11 = ssub.s32 256, 256
      %12 = vsyncadd [#allocation3], %s11
      %s14 = sshll.u32 [#allocation2], 4
      %s15 = int_to_ptr.vmem [resolvable:$true] %s14
      %17 = dma.hbm_to_vmem [thread:$0]  %s0, 256, %s15, [#allocation3]
    $region5: #{tpu_custom_call.1} parent=1 // pred_fallthru
      _
    // Predicated region
    $region6: #{tpu_custom_call.1} parent=1 // pred_check
      _
    $region7: #{tpu_custom_call.1} parent=1 // pred_check_branch
      %19 = sbr.rel (0) target = $region9
    $region8: #{tpu_custom_call.1} parent=1 // pred_region
      %20 = dma.done [#allocation3], 256
    $region9: #{tpu_custom_call.1} parent=1 // pred_fallthru
      _
    %v21 = vld [vmem:[#allocation2] sm:$0xff]
    %v22 = vld [vmem:[#allocation2 + $0x8] sm:$0xff]
    %25 = vrot.lane.b32.xlu0 %v21, 16
    %v26 = vpop.permute.xlu0 %25
    %27 = vrot.lane.b32.xlu0 %v22, 16
    %v28 = vpop.permute.xlu0 %27
    %vm29 = vcmask 130048
    %v30 = vsel %vm29, %v26, %v28
    %v33 = vsub.f32 %v21, %v26
    %v34 = vsub.f32 %v22, %v30
    %v35 = vand.u32 2147483647, %v33
    %v36 = vand.u32 2147483647, %v34
    %39 = vrot.lane.b32.xlu0 %v35, 112
    %v40 = vpop.permute.xlu0 %39
    %41 = vrot.lane.b32.xlu0 %v36, 112
    %v42 = vpop.permute.xlu0 %41
    %vm43 = vcmask 916480
    %v44 = vsel %vm43, %v40, %v42
    %v47 = vsel %vm43, %v42, 0.0
    %v48 = vadd.f32 %v44, %v47
    %49 = vadd.xlane.f32.xlu0 %v48
    %v50 = vpop.xlane.xlu0 %49
    %v51 = vrot.slane %v50, 4
    %v52 = vadd.f32 %v50, %v51
    %v53 = vrot.slane %v52, 2
    %v54 = vadd.f32 %v52, %v53
    %v55 = vrot.slane %v54, 1
    %v56 = vadd.f32 %v54, %v55
    %s57 = vtos %v56
    %58 = vrot.lane.b32.xlu0 %v21, 1
    %v59 = vpop.permute.xlu0 %58
    %60 = vrot.lane.b32.xlu0 %v22, 1
    %v61 = vpop.permute.xlu0 %60
    %vm62 = vcmask 7168
    %v63 = vsel %vm62, %v59, %v61
    %v66 = vsub.f32 %v21, %v59
    %v67 = vsub.f32 %v22, %v63
    %v68 = vand.u32 2147483647, %v66
    %v69 = vand.u32 2147483647, %v67
    %72 = vrot.lane.b32.xlu0 %v68, 127
    %v73 = vpop.permute.xlu0 %72
    %74 = vrot.lane.b32.xlu0 %v69, 127
    %v75 = vpop.permute.xlu0 %74
    %vm76 = vcmask 1039360
    %v77 = vsel %vm76, %v73, %v75
    %v80 = vsel %vm76, %v75, 0.0
    %v81 = vadd.f32 %v77, %v80
    %82 = vadd.xlane.f32.xlu0 %v81
    %v83 = vpop.xlane.xlu0 %82
    %v84 = vrot.slane %v83, 4
    %v85 = vadd.f32 %v83, %v84
    %v86 = vrot.slane %v85, 2
    %v87 = vadd.f32 %v85, %v86
    %v88 = vrot.slane %v87, 1
    %v89 = vadd.f32 %v87, %v88
    %s90 = vtos %v89
    %91 = vrot.lane.b32.xlu0 %v68, 112
    %v92 = vpop.permute.xlu0 %91
    %v94 = vsel %vm62, %v92, 0.0
    %95 = vadd.xlane.f32.xlu0 %v94
    %v96 = vpop.xlane.xlu0 %95
    %v97 = vrot.slane %v96, 4
    %v98 = vadd.f32 %v96, %v97
    %v99 = vrot.slane %v98, 2
    %v100 = vadd.f32 %v98, %v99
    %v101 = vrot.slane %v100, 1
    %v102 = vadd.f32 %v100, %v101
    %s103 = vtos %v102
    %s104 = ssub.f32 %s90, %s103
    %105 = vrot.lane.b32.xlu0 %v68, 96
    %v106 = vpop.permute.xlu0 %105
    %v108 = vsel %vm62, %v106, 0.0
    %109 = vadd.xlane.f32.xlu0 %v108
    %v110 = vpop.xlane.xlu0 %109
    %v111 = vrot.slane %v110, 4
    %v112 = vadd.f32 %v110, %v111
    %v113 = vrot.slane %v112, 2
    %v114 = vadd.f32 %v112, %v113
    %v115 = vrot.slane %v114, 1
    %v116 = vadd.f32 %v114, %v115
    %s117 = vtos %v116
    %s118 = ssub.f32 %s104, %s117
    %119 = vrot.lane.b32.xlu0 %v68, 80
    %v120 = vpop.permute.xlu0 %119
    %v122 = vsel %vm62, %v120, 0.0
    %123 = vadd.xlane.f32.xlu0 %v122
    %v124 = vpop.xlane.xlu0 %123
    %v125 = vrot.slane %v124, 4
    %v126 = vadd.f32 %v124, %v125
    %v127 = vrot.slane %v126, 2
    %v128 = vadd.f32 %v126, %v127
    %v129 = vrot.slane %v128, 1
    %v130 = vadd.f32 %v128, %v129
    %s131 = vtos %v130
    %s132 = ssub.f32 %s118, %s131
    %133 = vrot.lane.b32.xlu0 %v68, 64
    %v134 = vpop.permute.xlu0 %133
    %v136 = vsel %vm62, %v134, 0.0
    %137 = vadd.xlane.f32.xlu0 %v136
    %v138 = vpop.xlane.xlu0 %137
    %v139 = vrot.slane %v138, 4
    %v140 = vadd.f32 %v138, %v139
    %v141 = vrot.slane %v140, 2
    %v142 = vadd.f32 %v140, %v141
    %v143 = vrot.slane %v142, 1
    %v144 = vadd.f32 %v142, %v143
    %s145 = vtos %v144
    %s146 = ssub.f32 %s132, %s145
    %147 = vrot.lane.b32.xlu0 %v68, 48
    %v148 = vpop.permute.xlu0 %147
    %v150 = vsel %vm62, %v148, 0.0
    %151 = vadd.xlane.f32.xlu0 %v150
    %v152 = vpop.xlane.xlu0 %151
    %v153 = vrot.slane %v152, 4
    %v154 = vadd.f32 %v152, %v153
    %v155 = vrot.slane %v154, 2
    %v156 = vadd.f32 %v154, %v155
    %v157 = vrot.slane %v156, 1
    %v158 = vadd.f32 %v156, %v157
    %s159 = vtos %v158
    %s160 = ssub.f32 %s146, %s159
    %161 = vrot.lane.b32.xlu0 %v68, 32
    %v162 = vpop.permute.xlu0 %161
    %v164 = vsel %vm62, %v162, 0.0
    %165 = vadd.xlane.f32.xlu0 %v164
    %v166 = vpop.xlane.xlu0 %165
    %v167 = vrot.slane %v166, 4
    %v168 = vadd.f32 %v166, %v167
    %v169 = vrot.slane %v168, 2
    %v170 = vadd.f32 %v168, %v169
    %v171 = vrot.slane %v170, 1
    %v172 = vadd.f32 %v170, %v171
    %s173 = vtos %v172
    %s174 = ssub.f32 %s160, %s173
    %175 = vrot.lane.b32.xlu0 %v68, 16
    %v176 = vpop.permute.xlu0 %175
    %v178 = vsel %vm62, %v176, 0.0
    %179 = vadd.xlane.f32.xlu0 %v178
    %v180 = vpop.xlane.xlu0 %179
    %v181 = vrot.slane %v180, 4
    %v182 = vadd.f32 %v180, %v181
    %v183 = vrot.slane %v182, 2
    %v184 = vadd.f32 %v182, %v183
    %v185 = vrot.slane %v184, 1
    %v186 = vadd.f32 %v184, %v185
    %s187 = vtos %v186
    %s188 = ssub.f32 %s174, %s187
    %v189 = vsub.f32 %v22, %v59
    %v190 = vand.u32 2147483647, %v189
    %v191 = vsel %vm62, %v190, 0.0
    %192 = vadd.xlane.f32.xlu0 %v191
    %v193 = vpop.xlane.xlu0 %192
    %v194 = vrot.slane %v193, 4
    %v195 = vadd.f32 %v193, %v194
    %v196 = vrot.slane %v195, 2
    %v197 = vadd.f32 %v195, %v196
    %v198 = vrot.slane %v197, 1
    %v199 = vadd.f32 %v197, %v198
    %s200 = vtos %v199
    %s201 = ssub.f32 %s188, %s200
    %v203 = vsub.f32 %v22, %v61
    %v204 = vand.u32 2147483647, %v203
    %206 = vrot.lane.b32.xlu0 %v204, 112
    %v207 = vpop.permute.xlu0 %206
    %v209 = vsel %vm62, %v207, 0.0
    %210 = vadd.xlane.f32.xlu0 %v209
    %v211 = vpop.xlane.xlu0 %210
    %v212 = vrot.slane %v211, 4
    %v213 = vadd.f32 %v211, %v212
    %v214 = vrot.slane %v213, 2
    %v215 = vadd.f32 %v213, %v214
    %v216 = vrot.slane %v215, 1
    %v217 = vadd.f32 %v215, %v216
    %s218 = vtos %v217
    %s219 = ssub.f32 %s201, %s218
    %220 = vrot.lane.b32.xlu0 %v204, 96
    %v221 = vpop.permute.xlu0 %220
    %v223 = vsel %vm62, %v221, 0.0
    %224 = vadd.xlane.f32.xlu0 %v223
    %v225 = vpop.xlane.xlu0 %224
    %v226 = vrot.slane %v225, 4
    %v227 = vadd.f32 %v225, %v226
    %v228 = vrot.slane %v227, 2
    %v229 = vadd.f32 %v227, %v228
    %v230 = vrot.slane %v229, 1
    %v231 = vadd.f32 %v229, %v230
    %s232 = vtos %v231
    %s233 = ssub.f32 %s219, %s232
    %234 = vrot.lane.b32.xlu0 %v204, 80
    %v235 = vpop.permute.xlu0 %234
    %v237 = vsel %vm62, %v235, 0.0
    %238 = vadd.xlane.f32.xlu0 %v237
    %v239 = vpop.xlane.xlu0 %238
    %v240 = vrot.slane %v239, 4
    %v241 = vadd.f32 %v239, %v240
    %v242 = vrot.slane %v241, 2
    %v243 = vadd.f32 %v241, %v242
    %v244 = vrot.slane %v243, 1
    %v245 = vadd.f32 %v243, %v244
    %s246 = vtos %v245
    %s247 = ssub.f32 %s233, %s246
    %248 = vrot.lane.b32.xlu0 %v204, 64
    %v249 = vpop.permute.xlu0 %248
    %v251 = vsel %vm62, %v249, 0.0
    %252 = vadd.xlane.f32.xlu0 %v251
    %v253 = vpop.xlane.xlu0 %252
    %v254 = vrot.slane %v253, 4
    %v255 = vadd.f32 %v253, %v254
    %v256 = vrot.slane %v255, 2
    %v257 = vadd.f32 %v255, %v256
    %v258 = vrot.slane %v257, 1
    %v259 = vadd.f32 %v257, %v258
    %s260 = vtos %v259
    %s261 = ssub.f32 %s247, %s260
    %262 = vrot.lane.b32.xlu0 %v204, 48
    %v263 = vpop.permute.xlu0 %262
    %v265 = vsel %vm62, %v263, 0.0
    %266 = vadd.xlane.f32.xlu0 %v265
    %v267 = vpop.xlane.xlu0 %266
    %v268 = vrot.slane %v267, 4
    %v269 = vadd.f32 %v267, %v268
    %v270 = vrot.slane %v269, 2
    %v271 = vadd.f32 %v269, %v270
    %v272 = vrot.slane %v271, 1
    %v273 = vadd.f32 %v271, %v272
    %s274 = vtos %v273
    %s275 = ssub.f32 %s261, %s274
    %276 = vrot.lane.b32.xlu0 %v204, 32
    %v277 = vpop.permute.xlu0 %276
    %v279 = vsel %vm62, %v277, 0.0
    %280 = vadd.xlane.f32.xlu0 %v279
    %v281 = vpop.xlane.xlu0 %280
    %v282 = vrot.slane %v281, 4
    %v283 = vadd.f32 %v281, %v282
    %v284 = vrot.slane %v283, 2
    %v285 = vadd.f32 %v283, %v284
    %v286 = vrot.slane %v285, 1
    %v287 = vadd.f32 %v285, %v286
    %s288 = vtos %v287
    %s289 = ssub.f32 %s275, %s288
    %290 = vrot.lane.b32.xlu0 %v204, 16
    %v291 = vpop.permute.xlu0 %290
    %v293 = vsel %vm62, %v291, 0.0
    %294 = vadd.xlane.f32.xlu0 %v293
    %v295 = vpop.xlane.xlu0 %294
    %v296 = vrot.slane %v295, 4
    %v297 = vadd.f32 %v295, %v296
    %v298 = vrot.slane %v297, 2
    %v299 = vadd.f32 %v297, %v298
    %v300 = vrot.slane %v299, 1
    %v301 = vadd.f32 %v299, %v300
    %s302 = vtos %v301
    %s303 = ssub.f32 %s289, %s302
    %v304 = vlaneseq
    %v305 = vshrl.u32 %v304, 7
    %vm306 = vcmp.eq.s32.totalorder %v305, 0
    %v307 = vstv %s57
    %v308 = vsel %vm306, %v307, 0.0
    %vm309 = vcmp.eq.s32.totalorder %v305, 1
    %v310 = vstv %s303
    %v311 = vsel %vm309, %v310, 0.0
    %v312 = vadd.f32 %v308, %v311
    %313 = vst [vmem:[#allocation5] sm:$0xff] %v312
    // Predicated region
    $region10: #{tpu_custom_call.1} parent=1 // pred_check
      _
    $region11: #{tpu_custom_call.1} parent=1 // pred_check_branch
      %315 = sbr.rel (0) target = $region13
    $region12: #{tpu_custom_call.1} parent=1 // pred_region
      %s317 = ssub.s32 128, 128
      %318 = vsyncadd [#allocation4], %s317
      %s320 = sshll.u32 [#allocation5], 4
      %s321 = int_to_ptr.vmem [resolvable:$true] %s320
      %323 = dma.vmem_to_hbm [thread:$0]  %s321, 128, %s1, [#allocation4]
    $region13: #{tpu_custom_call.1} parent=1 // pred_fallthru
      _
    // Predicated region
    $region14: #{tpu_custom_call.1} parent=1 // pred_check
      _
    $region15: #{tpu_custom_call.1} parent=1 // pred_check_branch
      %325 = sbr.rel (0) target = $region17
    $region16: #{tpu_custom_call.1} parent=1 // pred_region
      %326 = dma.done [#allocation4], 128
    $region17: #{tpu_custom_call.1} parent=1 // pred_fallthru
      _
    %327 = vsyncpa [#allocation3], 1
    %328 = vsyncpa [#allocation4], 1

</llo_original>
